<compile_context>
chip_gen: v5e
topology: v5e:2x2
jax: 0.10.0
libtpu: 0.0.40
codegen_flags: <defaults>
</compile_context>

<pallas_src>
import functools

import jax
import jax.numpy as jnp
import numpy as np
from jax.experimental import pallas as pl
from jax.experimental.pallas import tpu as pltpu


def _focal_loss_kernel(logits_ref, tgt_ref, alpha_ref,
                       focal_acc_ref, alpha_acc_ref,
                       *, gamma, num_classes, hw, needs_mask):
    """One grid step processes a dense (S, L) pixel tile of one batch image.

    logits_ref    : (C, S, L) raw logits (native dtype, cast to f32 here), VMEM
    tgt_ref       : (S, L)    i32 class index per pixel, VMEM
    alpha_ref     : (C,)      f32 per-class alpha weights, SMEM (scalar reads)
    focal_acc_ref : (S, L)    f32 focal accumulator (resident over inner axis)
    alpha_acc_ref : (S, L)    f32 alpha accumulator (resident over inner axis)
    """
    ji = pl.program_id(2)

    @pl.when(ji == 0)
    def _init():
        focal_acc_ref[...] = jnp.zeros_like(focal_acc_ref)
        alpha_acc_ref[...] = jnp.zeros_like(alpha_acc_ref)

    tgt = tgt_ref[...]                                           # (S, L) i32

    # ---- class-axis reductions as an unrolled elementwise loop over C ------
    x_max = logits_ref[0].astype(jnp.float32)
    for i in range(1, num_classes):
        x_max = jnp.maximum(x_max, logits_ref[i].astype(jnp.float32))

    sum_exp = jnp.zeros_like(x_max)
    x_t = jnp.zeros_like(x_max)                 # logit at the target class
    alpha_row = jnp.zeros_like(x_max)           # alpha[target]
    for i in range(num_classes):
        xi = logits_ref[i].astype(jnp.float32)
        sum_exp = sum_exp + jnp.exp(xi - x_max)
        hit = tgt == i                          # reuse mask for both gathers
        x_t = jnp.where(hit, xi, x_t)
        alpha_row = jnp.where(hit, alpha_ref[i], alpha_row)      # SMEM scalar

    lse = jnp.log(sum_exp)
    # pt = softmax(x)[target] + eps ; logpt = log(pt)  (eps before log, as ref)
    pt = jnp.exp(x_t - x_max - lse) + 1e-10                      # (S, L)
    logpt = jnp.log(pt)

    one_minus_pt = 1.0 - pt
    if float(gamma) == 2.0:          # avoid the generic pow path for default
        modulator = one_minus_pt * one_minus_pt
    else:
        # eps can push pt > 1 -> clamp base so exp(gamma*log(x)) stays finite
        modulator = jnp.maximum(one_minus_pt, 0.0) ** gamma
    focal = -modulator * logpt                                   # (S, L)

    if needs_mask:
        s, l = focal.shape
        combined = pl.program_id(1) * pl.num_programs(2) + ji
        total = pl.num_programs(1) * pl.num_programs(2)
        is_last = combined == total - 1

        @pl.when(jnp.logical_not(is_last))
        def _accumulate():                      # all tiles but the last: dense
            focal_acc_ref[...] += focal
            alpha_acc_ref[...] += alpha_row

        @pl.when(is_last)
        def _accumulate_tail():                 # only the last tile is masked
            row = jax.lax.broadcasted_iota(jnp.int32, (s, l), 0)
            lane = jax.lax.broadcasted_iota(jnp.int32, (s, l), 1)
            pix = (combined * s + row) * l + lane
            valid = pix < hw
            focal_acc_ref[...] += jnp.where(valid, focal, 0.0)
            alpha_acc_ref[...] += jnp.where(valid, alpha_row, 0.0)
    else:
        focal_acc_ref[...] += focal
        alpha_acc_ref[...] += alpha_row


def _pick_lanes(hw):
    """Lane width L for the 2-D pixel layout (prefer wide, divisor of HW)."""
    for lanes in (512, 256, 128):
        if hw >= lanes and hw % lanes == 0:
            return lanes, False
    if hw < 128:
        return hw, False              # block dim == full array dim (allowed)
    return 128, True                  # rare: HW not a multiple of 128 -> pad


def focal_loss_pallas(logits_nchw, target, alpha, *, gamma=2.0,
                      size_average=True,
                      target_block_bytes=2 * 1024 * 1024,
                      vmem_budget_bytes=20 * 1024 * 1024):
    """Pallas implementation of FocalLoss.forward.

    logits_nchw : (N, C, H, W) float logits (pre-softmax), any float dtype
    target      : (N, H, W)    integer class labels in [0, C)
    alpha       : (C,)         per-class weights (already normalized)
    """
    n, c, h, w = logits_nchw.shape
    hw = h * w

    # ---- 2-D pixel layout: (N, C, HW) -> (N, C, R, L); pure reshape --------
    lanes, needs_pad = _pick_lanes(hw)
    rows_total = pl.cdiv(hw, lanes)
    hw_pad = rows_total * lanes

    x = logits_nchw.reshape(n, c, hw)
    tgt = target.reshape(n, hw).astype(jnp.int32)
    if needs_pad:
        x = jnp.pad(x, ((0, 0), (0, 0), (0, hw_pad - hw)))
        tgt = jnp.pad(tgt, ((0, 0), (0, hw_pad - hw)))
    x = x.reshape(n, c, rows_total, lanes)
    tgt = tgt.reshape(n, rows_total, lanes)
    alpha1d = alpha.reshape(-1).astype(jnp.float32)

    # ---- pick the row tile S (multiple of 8, ~2 MiB logits blocks) ---------
    itemsize = jnp.dtype(x.dtype).itemsize
    bytes_per_row_in = (c * itemsize + 4) * lanes        # logits + i32 targets

    s = max(8, int(target_block_bytes) // (c * itemsize * lanes))
    s = max(8, (s // 8) * 8)

    def _working_set(rows):
        inputs = 2 * rows * bytes_per_row_in             # double-buffered inputs
        accs = 4 * rows * lanes * 4                      # 2 resident f32 accumulators
        temps = 8 * rows * lanes * 4                     # mosaic vector temporaries
        return inputs + accs + temps

    while s > 8 and _working_set(s) > vmem_budget_bytes:
        s = max(8, (s // 2 // 8) * 8)
    if s >= rows_total:
        s = rows_total                                   # full row axis, one tile

    num_j = pl.cdiv(rows_total, s)
    needs_mask = needs_pad or (rows_total % s != 0)

    # Split pixel tiles into (jo "parallel", ji "arbitrary") so both v7x
    # TensorCores get work even when N is small.
    num_jo = 2 if (num_j >= 2 and num_j % 2 == 0) else 1
    num_ji = num_j // num_jo

    kernel = functools.partial(_focal_loss_kernel, gamma=gamma, num_classes=c,
                               hw=hw, needs_mask=needs_mask)

    focal_acc, alpha_acc = pl.pallas_call(
        kernel,
        out_shape=(jax.ShapeDtypeStruct((n, num_jo, s, lanes), jnp.float32),
                   jax.ShapeDtypeStruct((n, num_jo, s, lanes), jnp.float32)),
        grid_spec=pltpu.PrefetchScalarGridSpec(
            num_scalar_prefetch=0,
            grid=(n, num_jo, num_ji),
            in_specs=[
                pl.BlockSpec((None, c, s, lanes),
                             lambda b, o, i: (b, 0, o * num_ji + i, 0)),  # logits
                pl.BlockSpec((None, s, lanes),
                             lambda b, o, i: (b, o * num_ji + i, 0)),     # targets
                pl.BlockSpec(memory_space=pltpu.MemorySpace.SMEM),        # alpha
            ],
            out_specs=(
                pl.BlockSpec((None, None, s, lanes),
                             lambda b, o, i: (b, o, 0, 0)),               # focal acc
                pl.BlockSpec((None, None, s, lanes),
                             lambda b, o, i: (b, o, 0, 0)),               # alpha acc
            ),
        ),
        compiler_params=pltpu.CompilerParams(
            dimension_semantics=("parallel", "parallel", "arbitrary"),
            vmem_limit_bytes=32 * 1024 * 1024),
    )(x, tgt, alpha1d)

    sum_focal = jnp.sum(focal_acc)
    sum_alpha = jnp.sum(alpha_acc)
    m = n * hw

    # Reproduce PyTorch's (M,1,1) x (M,) broadcast (outer product) exactly.
    if size_average:
        return (sum_alpha / m) * (sum_focal / m)
    return sum_alpha * sum_focal


def focal_loss_reference(logits_nchw, target, alpha, *, gamma=2.0,
                         size_average=True):
    """Pure-JAX transcription of FocalLoss.forward (for verification)."""
    n, c, h, w = logits_nchw.shape
    p = jax.nn.softmax(logits_nchw, axis=1)
    p = jnp.transpose(p, (0, 2, 3, 1)).reshape(-1, c)
    t = target.reshape(-1)
    oh = jax.nn.one_hot(t, c, dtype=jnp.float32)
    pt = jnp.sum(oh * p, axis=1) + 1e-10
    logpt = jnp.log(pt)
    focal = -((1.0 - pt) ** gamma) * logpt
    a = alpha[t]
    if size_average:
        return jnp.mean(a) * jnp.mean(focal)   # mean over the (M,1,M) broadcast
    return jnp.sum(a) * jnp.sum(focal)


if __name__ == "__main__":
    key = jax.random.PRNGKey(0)
    k_x, k_t = jax.random.split(key)

    N, C, H, W = 2, 4, 16, 16          # M = N*H*W = 512 pixels, 4 classes
    logits = jax.random.normal(k_x, (N, C, H, W), dtype=jnp.float32)
    target = jax.random.randint(k_t, (N, H, W), 0, C, dtype=jnp.int32)

    # Deterministic alpha: FocalLoss(num_class=4, alpha=[1,2,3,4]) init path
    # -> normalized to sum to 1 (as in __init__).
    alpha = jnp.array([1.0, 2.0, 3.0, 4.0], dtype=jnp.float32)
    alpha = alpha / jnp.sum(alpha)
    gamma = 2.0

    loss = focal_loss_pallas(logits, target, alpha, gamma=gamma,
                             size_average=True)
    loss = jax.block_until_ready(loss)
    loss_ref = focal_loss_reference(logits, target, alpha, gamma=gamma,
                                    size_average=True)
    np.testing.assert_allclose(np.asarray(loss), np.asarray(loss_ref),
                               rtol=1e-5, atol=1e-6)

    # sum reduction
    loss_sum = jax.block_until_ready(
        focal_loss_pallas(logits, target, alpha, gamma=gamma,
                          size_average=False))
    loss_sum_ref = focal_loss_reference(logits, target, alpha, gamma=gamma,
                                        size_average=False)
    np.testing.assert_allclose(np.asarray(loss_sum), np.asarray(loss_sum_ref),
                               rtol=1e-5, atol=1e-4)

    # HW not a multiple of 128 -> exercises the padded / masked tail path
    H2, W2 = 13, 13
    logits2 = jax.random.normal(k_x, (N, C, H2, W2), dtype=jnp.float32)
    target2 = jax.random.randint(k_t, (N, H2, W2), 0, C, dtype=jnp.int32)
    loss2 = jax.block_until_ready(
        focal_loss_pallas(logits2, target2, alpha, gamma=gamma,
                          size_average=True))
    loss2_ref = focal_loss_reference(logits2, target2, alpha, gamma=gamma,
                                     size_average=True)
    np.testing.assert_allclose(np.asarray(loss2), np.asarray(loss2_ref),
                               rtol=1e-5, atol=1e-6)

    print("KERNEL_OK")
</pallas_src>

<mosaic_0001>
module attributes {stable_mosaic.version = 11 : i64} {
  func.func @_focal_loss_kernel(%arg0: i32, %arg1: i32, %arg2: i32, %arg3: memref<1x4x1x256xf32, #tpu.memory_space<vmem>>, %arg4: memref<1x1x256xi32, #tpu.memory_space<vmem>>, %arg5: memref<4xf32, #tpu.memory_space<smem>>, %arg6: memref<1x1x1x256xf32, #tpu.memory_space<vmem>>, %arg7: memref<1x1x1x256xf32, #tpu.memory_space<vmem>>) attributes {dimension_semantics = [#tpu.dimension_semantics<parallel>, #tpu.dimension_semantics<parallel>, #tpu.dimension_semantics<arbitrary>], iteration_bounds = array<i64: 2, 1, 1>, scalar_prefetch = 0 : i64, scratch_operands = 0 : i64, tpu.core_type = #tpu.core_type<tc>, window_params = [{transform_indices = @transform_0, window_bounds = array<i64: 1, 4, 1, 256>}, {transform_indices = @transform_1, window_bounds = array<i64: 1, 1, 256>}, {transform_indices = @transform_2, window_bounds = array<i64: 4>}, {transform_indices = @transform_3, window_bounds = array<i64: 1, 1, 1, 256>}, {transform_indices = @transform_4, window_bounds = array<i64: 1, 1, 1, 256>}]} {
    %c0_i32 = arith.constant 0 : i32
    %0 = arith.cmpi eq, %arg2, %c0_i32 : i32
    %1 = arith.extui %0 : i1 to i32
    %c0_i32_0 = arith.constant 0 : i32
    %2 = arith.cmpi ne, %1, %c0_i32_0 : i32
    scf.if %2 {
      %cst_58 = arith.constant 0.000000e+00 : f32
      %88 = vector.broadcast %cst_58 : f32 to vector<1x256xf32>
      %c0_59 = arith.constant 0 : index
      %c0_60 = arith.constant 0 : index
      %c0_61 = arith.constant 0 : index
      %c0_62 = arith.constant 0 : index
      %89 = vector.load %arg6[%c0_59, %c0_60, %c0_61, %c0_62] : memref<1x1x1x256xf32, #tpu.memory_space<vmem>>, vector<1x1x1x256xf32>
      %90 = vector.shape_cast %89 : vector<1x1x1x256xf32> to vector<1x256xf32>
      %91 = vector.shape_cast %88 : vector<1x256xf32> to vector<1x1x1x256xf32>
      tpu.vector_store %arg6[%c0_59, %c0_60, %c0_61, %c0_62], %91 {strides = array<i32>} : memref<1x1x1x256xf32, #tpu.memory_space<vmem>>, vector<1x1x1x256xf32>,
      %cst_63 = arith.constant 0.000000e+00 : f32
      %92 = vector.broadcast %cst_63 : f32 to vector<1x256xf32>
      %c0_64 = arith.constant 0 : index
      %c0_65 = arith.constant 0 : index
      %c0_66 = arith.constant 0 : index
      %c0_67 = arith.constant 0 : index
      %93 = vector.load %arg7[%c0_64, %c0_65, %c0_66, %c0_67] : memref<1x1x1x256xf32, #tpu.memory_space<vmem>>, vector<1x1x1x256xf32>
      %94 = vector.shape_cast %93 : vector<1x1x1x256xf32> to vector<1x256xf32>
      %95 = vector.shape_cast %92 : vector<1x256xf32> to vector<1x1x1x256xf32>
      tpu.vector_store %arg7[%c0_64, %c0_65, %c0_66, %c0_67], %95 {strides = array<i32>} : memref<1x1x1x256xf32, #tpu.memory_space<vmem>>, vector<1x1x1x256xf32>,
    } else {
    }
    %c0 = arith.constant 0 : index
    %c0_1 = arith.constant 0 : index
    %c0_2 = arith.constant 0 : index
    %3 = vector.load %arg4[%c0, %c0_1, %c0_2] : memref<1x1x256xi32, #tpu.memory_space<vmem>>, vector<1x1x256xi32>
    %4 = vector.shape_cast %3 : vector<1x1x256xi32> to vector<1x256xi32>
    %c0_3 = arith.constant 0 : index
    %c0_4 = arith.constant 0 : index
    %c0_5 = arith.constant 0 : index
    %c0_6 = arith.constant 0 : index
    %5 = vector.load %arg3[%c0_3, %c0_4, %c0_5, %c0_6] : memref<1x4x1x256xf32, #tpu.memory_space<vmem>>, vector<1x1x1x256xf32>
    %6 = vector.shape_cast %5 : vector<1x1x1x256xf32> to vector<1x256xf32>
    %c0_7 = arith.constant 0 : index
    %c1 = arith.constant 1 : index
    %c0_8 = arith.constant 0 : index
    %c0_9 = arith.constant 0 : index
    %7 = vector.load %arg3[%c0_7, %c1, %c0_8, %c0_9] : memref<1x4x1x256xf32, #tpu.memory_space<vmem>>, vector<1x1x1x256xf32>
    %8 = vector.shape_cast %7 : vector<1x1x1x256xf32> to vector<1x256xf32>
    %9 = arith.maximumf %6, %8 : vector<1x256xf32>
    %c0_10 = arith.constant 0 : index
    %c2 = arith.constant 2 : index
    %c0_11 = arith.constant 0 : index
    %c0_12 = arith.constant 0 : index
    %10 = vector.load %arg3[%c0_10, %c2, %c0_11, %c0_12] : memref<1x4x1x256xf32, #tpu.memory_space<vmem>>, vector<1x1x1x256xf32>
    %11 = vector.shape_cast %10 : vector<1x1x1x256xf32> to vector<1x256xf32>
    %12 = arith.maximumf %9, %11 : vector<1x256xf32>
    %c0_13 = arith.constant 0 : index
    %c3 = arith.constant 3 : index
    %c0_14 = arith.constant 0 : index
    %c0_15 = arith.constant 0 : index
    %13 = vector.load %arg3[%c0_13, %c3, %c0_14, %c0_15] : memref<1x4x1x256xf32, #tpu.memory_space<vmem>>, vector<1x1x1x256xf32>
    %14 = vector.shape_cast %13 : vector<1x1x1x256xf32> to vector<1x256xf32>
    %15 = arith.maximumf %12, %14 : vector<1x256xf32>
    %cst = arith.constant 0.000000e+00 : f32
    %16 = vector.broadcast %cst : f32 to vector<1x256xf32>
    %cst_16 = arith.constant 0.000000e+00 : f32
    %17 = vector.broadcast %cst_16 : f32 to vector<1x256xf32>
    %cst_17 = arith.constant 0.000000e+00 : f32
    %18 = vector.broadcast %cst_17 : f32 to vector<1x256xf32>
    %c0_18 = arith.constant 0 : index
    %c0_19 = arith.constant 0 : index
    %c0_20 = arith.constant 0 : index
    %c0_21 = arith.constant 0 : index
    %19 = vector.load %arg3[%c0_18, %c0_19, %c0_20, %c0_21] : memref<1x4x1x256xf32, #tpu.memory_space<vmem>>, vector<1x1x1x256xf32>
    %20 = vector.shape_cast %19 : vector<1x1x1x256xf32> to vector<1x256xf32>
    %21 = arith.subf %20, %15 : vector<1x256xf32>
    %22 = math.exp %21 : vector<1x256xf32>
    %23 = arith.addf %16, %22 : vector<1x256xf32>
    %c0_i32_22 = arith.constant 0 : i32
    %24 = vector.broadcast %c0_i32_22 : i32 to vector<1x256xi32>
    %25 = arith.cmpi eq, %4, %24 : vector<1x256xi32>
    %26 = arith.select %25, %20, %17 : vector<1x256xi1>, vector<1x256xf32>
    %c0_23 = arith.constant 0 : index
    %27 = memref.load %arg5[%c0_23] : memref<4xf32, #tpu.memory_space<smem>>
    %28 = vector.broadcast %27 : f32 to vector<1x256xf32>
    %29 = arith.select %25, %28, %18 : vector<1x256xi1>, vector<1x256xf32>
    %c0_24 = arith.constant 0 : index
    %c1_25 = arith.constant 1 : index
    %c0_26 = arith.constant 0 : index
    %c0_27 = arith.constant 0 : index
    %30 = vector.load %arg3[%c0_24, %c1_25, %c0_26, %c0_27] : memref<1x4x1x256xf32, #tpu.memory_space<vmem>>, vector<1x1x1x256xf32>
    %31 = vector.shape_cast %30 : vector<1x1x1x256xf32> to vector<1x256xf32>
    %32 = arith.subf %31, %15 : vector<1x256xf32>
    %33 = math.exp %32 : vector<1x256xf32>
    %34 = arith.addf %23, %33 : vector<1x256xf32>
    %c1_i32 = arith.constant 1 : i32
    %35 = vector.broadcast %c1_i32 : i32 to vector<1x256xi32>
    %36 = arith.cmpi eq, %4, %35 : vector<1x256xi32>
    %37 = arith.select %36, %31, %26 : vector<1x256xi1>, vector<1x256xf32>
    %c1_28 = arith.constant 1 : index
    %38 = memref.load %arg5[%c1_28] : memref<4xf32, #tpu.memory_space<smem>>
    %39 = vector.broadcast %38 : f32 to vector<1x256xf32>
    %40 = arith.select %36, %39, %29 : vector<1x256xi1>, vector<1x256xf32>
    %c0_29 = arith.constant 0 : index
    %c2_30 = arith.constant 2 : index
    %c0_31 = arith.constant 0 : index
    %c0_32 = arith.constant 0 : index
    %41 = vector.load %arg3[%c0_29, %c2_30, %c0_31, %c0_32] : memref<1x4x1x256xf32, #tpu.memory_space<vmem>>, vector<1x1x1x256xf32>
    %42 = vector.shape_cast %41 : vector<1x1x1x256xf32> to vector<1x256xf32>
    %43 = arith.subf %42, %15 : vector<1x256xf32>
    %44 = math.exp %43 : vector<1x256xf32>
    %45 = arith.addf %34, %44 : vector<1x256xf32>
    %c2_i32 = arith.constant 2 : i32
    %46 = vector.broadcast %c2_i32 : i32 to vector<1x256xi32>
    %47 = arith.cmpi eq, %4, %46 : vector<1x256xi32>
    %48 = arith.select %47, %42, %37 : vector<1x256xi1>, vector<1x256xf32>
    %c2_33 = arith.constant 2 : index
    %49 = memref.load %arg5[%c2_33] : memref<4xf32, #tpu.memory_space<smem>>
    %50 = vector.broadcast %49 : f32 to vector<1x256xf32>
    %51 = arith.select %47, %50, %40 : vector<1x256xi1>, vector<1x256xf32>
    %c0_34 = arith.constant 0 : index
    %c3_35 = arith.constant 3 : index
    %c0_36 = arith.constant 0 : index
    %c0_37 = arith.constant 0 : index
    %52 = vector.load %arg3[%c0_34, %c3_35, %c0_36, %c0_37] : memref<1x4x1x256xf32, #tpu.memory_space<vmem>>, vector<1x1x1x256xf32>
    %53 = vector.shape_cast %52 : vector<1x1x1x256xf32> to vector<1x256xf32>
    %54 = arith.subf %53, %15 : vector<1x256xf32>
    %55 = math.exp %54 : vector<1x256xf32>
    %56 = arith.addf %45, %55 : vector<1x256xf32>
    %c3_i32 = arith.constant 3 : i32
    %57 = vector.broadcast %c3_i32 : i32 to vector<1x256xi32>
    %58 = arith.cmpi eq, %4, %57 : vector<1x256xi32>
    %59 = arith.select %58, %53, %48 : vector<1x256xi1>, vector<1x256xf32>
    %c3_38 = arith.constant 3 : index
    %60 = memref.load %arg5[%c3_38] : memref<4xf32, #tpu.memory_space<smem>>
    %61 = vector.broadcast %60 : f32 to vector<1x256xf32>
    %62 = arith.select %58, %61, %51 : vector<1x256xi1>, vector<1x256xf32>
    %63 = math.log %56 : vector<1x256xf32>
    %64 = arith.subf %59, %15 : vector<1x256xf32>
    %65 = arith.subf %64, %63 : vector<1x256xf32>
    %66 = math.exp %65 : vector<1x256xf32>
    %cst_39 = arith.constant 1.000000e-10 : f32
    %67 = vector.broadcast %cst_39 : f32 to vector<1x256xf32>
    %68 = arith.addf %66, %67 : vector<1x256xf32>
    %69 = math.log %68 : vector<1x256xf32>
    %cst_40 = arith.constant 1.000000e+00 : f32
    %70 = vector.broadcast %cst_40 : f32 to vector<1x256xf32>
    %71 = arith.subf %70, %68 : vector<1x256xf32>
    %72 = arith.mulf %71, %71 : vector<1x256xf32>
    %cst_41 = arith.constant 0.000000e+00 : f32
    %73 = vector.broadcast %cst_41 : f32 to vector<1x256xf32>
    %74 = arith.subf %73, %72 : vector<1x256xf32>
    %75 = arith.mulf %74, %69 : vector<1x256xf32>
    %c0_42 = arith.constant 0 : index
    %c0_43 = arith.constant 0 : index
    %c0_44 = arith.constant 0 : index
    %c0_45 = arith.constant 0 : index
    %76 = vector.load %arg6[%c0_42, %c0_43, %c0_44, %c0_45] : memref<1x1x1x256xf32, #tpu.memory_space<vmem>>, vector<1x1x1x256xf32>
    %77 = vector.shape_cast %76 : vector<1x1x1x256xf32> to vector<1x256xf32>
    %78 = arith.addf %77, %75 : vector<1x256xf32>
    %c0_46 = arith.constant 0 : index
    %c0_47 = arith.constant 0 : index
    %c0_48 = arith.constant 0 : index
    %c0_49 = arith.constant 0 : index
    %79 = vector.load %arg6[%c0_46, %c0_47, %c0_48, %c0_49] : memref<1x1x1x256xf32, #tpu.memory_space<vmem>>, vector<1x1x1x256xf32>
    %80 = vector.shape_cast %79 : vector<1x1x1x256xf32> to vector<1x256xf32>
    %81 = vector.shape_cast %78 : vector<1x256xf32> to vector<1x1x1x256xf32>
    tpu.vector_store %arg6[%c0_46, %c0_47, %c0_48, %c0_49], %81 {strides = array<i32>} : memref<1x1x1x256xf32, #tpu.memory_space<vmem>>, vector<1x1x1x256xf32>,
    %c0_50 = arith.constant 0 : index
    %c0_51 = arith.constant 0 : index
    %c0_52 = arith.constant 0 : index
    %c0_53 = arith.constant 0 : index
    %82 = vector.load %arg7[%c0_50, %c0_51, %c0_52, %c0_53] : memref<1x1x1x256xf32, #tpu.memory_space<vmem>>, vector<1x1x1x256xf32>
    %83 = vector.shape_cast %82 : vector<1x1x1x256xf32> to vector<1x256xf32>
    %84 = arith.addf %83, %62 : vector<1x256xf32>
    %c0_54 = arith.constant 0 : index
    %c0_55 = arith.constant 0 : index
    %c0_56 = arith.constant 0 : index
    %c0_57 = arith.constant 0 : index
    %85 = vector.load %arg7[%c0_54, %c0_55, %c0_56, %c0_57] : memref<1x1x1x256xf32, #tpu.memory_space<vmem>>, vector<1x1x1x256xf32>
    %86 = vector.shape_cast %85 : vector<1x1x1x256xf32> to vector<1x256xf32>
    %87 = vector.shape_cast %84 : vector<1x256xf32> to vector<1x1x1x256xf32>
    tpu.vector_store %arg7[%c0_54, %c0_55, %c0_56, %c0_57], %87 {strides = array<i32>} : memref<1x1x1x256xf32, #tpu.memory_space<vmem>>, vector<1x1x1x256xf32>,
    return
  }
  func.func @transform_0(%arg0: i32, %arg1: i32, %arg2: i32) -> (i32, i32, i32, i32) {
    %c1_i32 = arith.constant 1 : i32
    %0 = arith.muli %arg1, %c1_i32 : i32
    %1 = arith.addi %0, %arg2 : i32
    %c0_i32 = arith.constant 0 : i32
    %c0_i32_0 = arith.constant 0 : i32
    %c0_i32_1 = arith.constant 0 : i32
    return %arg0, %c0_i32, %1, %c0_i32_0 : i32, i32, i32, i32
  }
  func.func @transform_1(%arg0: i32, %arg1: i32, %arg2: i32) -> (i32, i32, i32) {
    %c1_i32 = arith.constant 1 : i32
    %0 = arith.muli %arg1, %c1_i32 : i32
    %1 = arith.addi %0, %arg2 : i32
    %c0_i32 = arith.constant 0 : i32
    %c0_i32_0 = arith.constant 0 : i32
    return %arg0, %1, %c0_i32 : i32, i32, i32
  }
  func.func @transform_2(%arg0: i32, %arg1: i32, %arg2: i32) -> i32 {
    %c0_i32 = arith.constant 0 : i32
    %c0_i32_0 = arith.constant 0 : i32
    return %c0_i32 : i32
  }
  func.func @transform_3(%arg0: i32, %arg1: i32, %arg2: i32) -> (i32, i32, i32, i32) {
    %c0_i32 = arith.constant 0 : i32
    %c0_i32_0 = arith.constant 0 : i32
    %c0_i32_1 = arith.constant 0 : i32
    return %arg0, %arg1, %c0_i32, %c0_i32_0 : i32, i32, i32, i32
  }
  func.func @transform_4(%arg0: i32, %arg1: i32, %arg2: i32) -> (i32, i32, i32, i32) {
    %c0_i32 = arith.constant 0 : i32
    %c0_i32_0 = arith.constant 0 : i32
    %c0_i32_1 = arith.constant 0 : i32
    return %arg0, %arg1, %c0_i32, %c0_i32_0 : i32, i32, i32, i32
  }
}

</mosaic_0001>

<llo_original>
// kernel: tpu_custom_call.1
$region0: #{tpu_custom_call.1}
  #allocation0 [shape = 'u32[]', space=smem, size = 0x4, offset = 0x4, fixed_abs, tag = 'smem constant byte address 0x4 - core index']
  #allocation1 [shape = 'u32[72,128]{1,0:T(1,128)}', space=vmem, size = 0x9000, scoped, tag = 'internal scratch']
  %s0 = inlined_call_operand.hbm [shape: f32[2,4,1,256], index: 0, kind: input, shape index: {}]
  %s1 = inlined_call_operand.hbm [shape: s32[2,1,256], index: 1, kind: input, shape index: {}]
  %s2 = inlined_call_operand.vmem [shape: f32[4], index: 2, kind: input, shape index: {}]
  %s3 = inlined_call_operand.hbm [shape: f32[2,1,1,256], index: 3, kind: output, shape index: {0}]
  %s4 = inlined_call_operand.hbm [shape: f32[2,1,1,256], index: 4, kind: output, shape index: {1}]
  %5 = xla_tuple %s3, %s4
  %s6 = sld [smem:[#allocation0]]
  $region69: #{tpu_custom_call.1} parent=0
    _
  %s8 = ssub.s32 1, %s6
  %s9 = scalar_select 0, %s8, %s6
  $region1: #{tpu_custom_call.1} parent=0
    #allocation2 [shape = 'u8[8192]{0}', space=vmem, size = 0x2000, scoped, tag = 'input window, operand 0']
    #allocation3 [shape = 's32[2]{0}', space=sflag, size = 0x8, scoped, tag = 'scoped memory for tpu_custom_call.1']
    #allocation4 [shape = 's32[2]{0}', space=sflag, size = 0x8, scoped, tag = 'scoped memory for tpu_custom_call.1']
    #allocation5 [shape = 's32[2]{0}', space=sflag, size = 0x8, scoped, tag = 'scoped memory for tpu_custom_call.1']
    #allocation6 [shape = 'u8[2048]{0}', space=vmem, size = 0x800, scoped, tag = 'input window, operand 1']
    #allocation7 [shape = 's32[2]{0}', space=sflag, size = 0x8, scoped, tag = 'scoped memory for tpu_custom_call.1']
    #allocation8 [shape = 'u8[512]{0}', space=smem, size = 0x200, scoped, tag = 'input window, operand 2, single buffered']
    #allocation9 [shape = 'u8[2048]{0}', space=vmem, size = 0x800, scoped, tag = 'output window, operand 0']
    #allocation10 [shape = 'u8[2048]{0}', space=vmem, size = 0x800, scoped, tag = 'output window, operand 1']
    #allocation11 [shape = 's32[2]{0}', space=sflag, size = 0x8, scoped, tag = 'scoped memory for tpu_custom_call.1']
    %10 = vsyncpa [#allocation3], 0
    %s11 = scalar_lea.sflag [#allocation3], 1
    %12 = vsyncpa %s11, 0
    %13 = vsyncpa [#allocation7], 0
    %s14 = scalar_lea.sflag [#allocation7], 1
    %15 = vsyncpa %s14, 0
    %16 = vsyncpa [#allocation5], 0
    %17 = vsyncpa [#allocation4], 0
    %s18 = scalar_lea.sflag [#allocation4], 1
    %19 = vsyncpa %s18, 0
    %20 = vsyncpa [#allocation11], 0
    %s21 = scalar_lea.sflag [#allocation11], 1
    %22 = vsyncpa %s21, 0
    loop: start=0, step=1, limit=4
    $region2: #{tpu_custom_call.1} parent=1 // loop_pre_header
      _
    $region3: #{tpu_custom_call.1} parent=1 // loop_header
      %s24 = sphi 0, %s28
      %p25 = scmp.ge.s32.totalorder %s24, 4
      %s31 = sphi 0, %s50
      %s32 = sphi 0, %s46
      %s33 = sphi 0, %s42
      %s34 = sphi 0, %s31
      %s35 = sphi 0, %s32
      %s36 = sphi 0, %s33
      %s37 = sphi 0, %s34
      %s38 = sphi 0, %s35
      %s39 = sphi 0, %s36
      %s57 = sphi 0, %s59
      %s60 = sphi 0, %s57
      %s61 = sphi 0, %s60
      %s77 = sphi 0, %s61
      %s87 = sphi 0, %s89
      %s90 = sphi 0, %s87
      %s91 = sphi 0, %s90
      %s107 = sphi 0, %s91
      %s111 = sphi 0, %s111
      %s113 = sphi 0, %s111
      %s114 = sphi 0, %s113
      %s128 = sphi 0, %s114
      %s136 = sphi 0, %s138
      %s139 = sphi 0, %s136
      %s140 = sphi 0, %s139
      %s156 = sphi 0, %s140
      %s164 = sphi 0, %s166
      %s167 = sphi 0, %s164
      %s168 = sphi 0, %s167
      %s184 = sphi 0, %s168
    $region4: #{tpu_custom_call.1} parent=1 // loop_header_branch
      %27 = sbr.rel (%p25) target = $region8
    $region5: #{tpu_custom_call.1} parent=1 // loop_body
      %s29 = ssub.s32 %s24, 1
      %s30 = ssub.s32 %s24, 2
      %s40 = sadd.s32 1, %s33
      %p41 = scmp.ge.s32.totalorder %s40, 1
      %s42 = scalar_select %p41, 0, %s40
      %s43 = sadd.s32 1, %s32
      %s44 = scalar_select %p41, %s43, %s32
      %p45 = scmp.ge.s32.totalorder %s44, 1
      %s46 = scalar_select %p45, 0, %s44
      %s47 = sadd.s32 1, %s31
      %s48 = scalar_select %p45, %s47, %s31
      %p49 = scmp.ge.s32.totalorder %s48, 2
      %s50 = scalar_select %p49, 0, %s48
      %s51 = sadd.s32 %s32, %s33
      %s52 = sadd.s32 %s46, %s42
      %s53 = ssub.s32 %s31, %s50
      %s54 = ssub.s32 %s51, %s52
      %s55 = sor.u32 %s53, %s54
      %p56 = scmp.eq.s32.totalorder %s55, 0
      %s58 = sadd.s32 %s57, 1
      %s59 = scalar_select %p56, %s57, %s58
      %p62 = pneg %p56
      %p63 = scmp.eq.s32.totalorder %s24, 1
      %p64 = por %p62, %p63
      %p65 = scmp.ne.s32.totalorder %s57, %s60
      %p66 = scmp.eq.s32.totalorder %s24, 0
      %p67 = por %p65, %p66
      %p68 = scmp.ne.s32.totalorder %s57, %s60
      %p69 = scmp.eq.s32.totalorder %s29, 1
      %p70 = por %p68, %p69
      %p71 = scmp.ne.s32.totalorder %s60, %s61
      %p72 = scmp.eq.s32.totalorder %s29, 0
      %p73 = por %p71, %p72
      %p74 = scmp.ne.s32.totalorder %s60, %s61
      %p75 = scmp.eq.s32.totalorder %s30, 1
      %p76 = por %p74, %p75
      %p78 = scmp.ne.s32.totalorder %s61, %s77
      %p79 = scmp.eq.s32.totalorder %s30, 0
      %p80 = por %p78, %p79
      %s81 = sadd.s32 %s32, %s33
      %s82 = sadd.s32 %s46, %s42
      %s83 = ssub.s32 %s31, %s50
      %s84 = ssub.s32 %s81, %s82
      %s85 = sor.u32 %s83, %s84
      %p86 = scmp.eq.s32.totalorder %s85, 0
      %s88 = sadd.s32 %s87, 1
      %s89 = scalar_select %p86, %s87, %s88
      %p92 = pneg %p86
      %p93 = scmp.eq.s32.totalorder %s24, 1
      %p94 = por %p92, %p93
      %p95 = scmp.ne.s32.totalorder %s87, %s90
      %p96 = scmp.eq.s32.totalorder %s24, 0
      %p97 = por %p95, %p96
      %p98 = scmp.ne.s32.totalorder %s87, %s90
      %p99 = scmp.eq.s32.totalorder %s29, 1
      %p100 = por %p98, %p99
      %p101 = scmp.ne.s32.totalorder %s90, %s91
      %p102 = scmp.eq.s32.totalorder %s29, 0
      %p103 = por %p101, %p102
      %p104 = scmp.ne.s32.totalorder %s90, %s91
      %p105 = scmp.eq.s32.totalorder %s30, 1
      %p106 = por %p104, %p105
      %p108 = scmp.ne.s32.totalorder %s91, %s107
      %p109 = scmp.eq.s32.totalorder %s30, 0
      %p110 = por %p108, %p109
      %s112 = sadd.s32 %s111, 1
      %p115 = scmp.eq.s32.totalorder %s24, 1
      %p116 = scmp.ne.s32.totalorder %s111, %s113
      %p117 = scmp.eq.s32.totalorder %s24, 0
      %p118 = por %p116, %p117
      %p119 = scmp.ne.s32.totalorder %s111, %s113
      %p120 = scmp.eq.s32.totalorder %s29, 1
      %p121 = por %p119, %p120
      %p122 = scmp.ne.s32.totalorder %s113, %s114
      %p123 = scmp.eq.s32.totalorder %s29, 0
      %p124 = por %p122, %p123
      %p125 = scmp.ne.s32.totalorder %s113, %s114
      %p126 = scmp.eq.s32.totalorder %s30, 1
      %p127 = por %p125, %p126
      %p129 = scmp.ne.s32.totalorder %s114, %s128
      %p130 = scmp.eq.s32.totalorder %s30, 0
      %p131 = por %p129, %p130
      %s132 = ssub.s32 %s31, %s50
      %s133 = ssub.s32 %s32, %s46
      %s134 = sor.u32 %s132, %s133
      %p135 = scmp.eq.s32.totalorder %s134, 0
      %s137 = sadd.s32 %s136, 1
      %s138 = scalar_select %p135, %s136, %s137
      %p141 = pneg %p135
      %p142 = scmp.eq.s32.totalorder %s24, 1
      %p143 = por %p141, %p142
      %p144 = scmp.ne.s32.totalorder %s136, %s139
      %p145 = scmp.eq.s32.totalorder %s24, 0
      %p146 = por %p144, %p145
      %p147 = scmp.ne.s32.totalorder %s136, %s139
      %p148 = scmp.eq.s32.totalorder %s29, 1
      %p149 = por %p147, %p148
      %p150 = scmp.ne.s32.totalorder %s139, %s140
      %p151 = scmp.eq.s32.totalorder %s29, 0
      %p152 = por %p150, %p151
      %p153 = scmp.ne.s32.totalorder %s139, %s140
      %p154 = scmp.eq.s32.totalorder %s30, 1
      %p155 = por %p153, %p154
      %p157 = scmp.ne.s32.totalorder %s140, %s156
      %p158 = scmp.eq.s32.totalorder %s30, 0
      %p159 = por %p157, %p158
      %s160 = ssub.s32 %s31, %s50
      %s161 = ssub.s32 %s32, %s46
      %s162 = sor.u32 %s160, %s161
      %p163 = scmp.eq.s32.totalorder %s162, 0
      %s165 = sadd.s32 %s164, 1
      %s166 = scalar_select %p163, %s164, %s165
      %p169 = pneg %p163
      %p170 = scmp.eq.s32.totalorder %s24, 1
      %p171 = por %p169, %p170
      %p172 = scmp.ne.s32.totalorder %s164, %s167
      %p173 = scmp.eq.s32.totalorder %s24, 0
      %p174 = por %p172, %p173
      %p175 = scmp.ne.s32.totalorder %s164, %s167
      %p176 = scmp.eq.s32.totalorder %s29, 1
      %p177 = por %p175, %p176
      %p178 = scmp.ne.s32.totalorder %s167, %s168
      %p179 = scmp.eq.s32.totalorder %s29, 0
      %p180 = por %p178, %p179
      %p181 = scmp.ne.s32.totalorder %s167, %s168
      %p182 = scmp.eq.s32.totalorder %s30, 1
      %p183 = por %p181, %p182
      %p185 = scmp.ne.s32.totalorder %s168, %s184
      %p186 = scmp.eq.s32.totalorder %s30, 0
      %p187 = por %p185, %p186
      %p188 = scmp.le.s32.totalorder 1, %s24
      %p189 = scmp.lt.s32.totalorder %s24, 3
      %p190 = pnand %p188, %p189
      %p191 = pneg %p190
      // Predicated region
      $region9: #{tpu_custom_call.1} parent=5 // pred_check
        _
      $region10: #{tpu_custom_call.1} parent=5 // pred_check_branch
        %193 = sbr.rel (%p190) target = $region12
      $region11: #{tpu_custom_call.1} parent=5 // pred_region
        %s194 = ssub.s32 %s24, 1
        // Predicated region
        $region13: #{tpu_custom_call.1} parent=11 // pred_check
          %p195 = pneg %p124
        $region14: #{tpu_custom_call.1} parent=11 // pred_check_branch
          %197 = sbr.rel (%p195) target = $region16
        $region15: #{tpu_custom_call.1} parent=11 // pred_region
          %199 = vsyncadd [#allocation5], 0
          %s201 = sshll.u32 %s2, 4
          %s202 = int_to_ptr.vmem [resolvable:$true] %s201
          %204 = dma.vmem_to_smem %s202, 16, [#allocation8], [#allocation5]
        $region16: #{tpu_custom_call.1} parent=11 // pred_fallthru
          _
      $region12: #{tpu_custom_call.1} parent=5 // pred_fallthru
        _
      %p205 = scmp.lt.s32.totalorder %s24, 2
      // Predicated region
      $region17: #{tpu_custom_call.1} parent=5 // pred_check
        %p206 = pneg %p205
      $region18: #{tpu_custom_call.1} parent=5 // pred_check_branch
        %208 = sbr.rel (%p206) target = $region20
      $region19: #{tpu_custom_call.1} parent=5 // pred_region
        // Predicated region
        $region21: #{tpu_custom_call.1} parent=19 // pred_check
          %p209 = pneg %p67
        $region22: #{tpu_custom_call.1} parent=19 // pred_check_branch
          %211 = sbr.rel (%p209) target = $region24
        $region23: #{tpu_custom_call.1} parent=19 // pred_region
          %s212 = sand.u32 %s57, 1
          %s213 = scalar_lea.sflag [#allocation3], %s212
          %s214 = sand.u32 %s57, 1
          %s215 = smul.addr %s214, 8
          %s216 = scalar_lea.vmem [#allocation2], %s215
          %s217 = sadd.s32 %s32, %s33
          %219 = vsyncadd %s213, 0
          %s220 = smul.addr %s217, 2
          %s221 = smul.addr %s31, 8
          %s222 = sadd.s32 %s220, %s221
          %s223 = scalar_lea.hbm %s0, %s222
          %s224 = sshll.u32 %s223, 4
          %s225 = int_to_ptr.hbm [resolvable:$true] %s224
          %s226 = sshll.u32 %s216, 4
          %s227 = int_to_ptr.vmem [resolvable:$true] %s226
          %232 = dma.hbm_to_vmem [thread:$0]  %s225, 128, %s227, %s213, 32, 32, 2
        $region24: #{tpu_custom_call.1} parent=19 // pred_fallthru
          _
        // Predicated region
        $region25: #{tpu_custom_call.1} parent=19 // pred_check
          %p233 = pneg %p97
        $region26: #{tpu_custom_call.1} parent=19 // pred_check_branch
          %235 = sbr.rel (%p233) target = $region28
        $region27: #{tpu_custom_call.1} parent=19 // pred_region
          %s236 = sand.u32 %s87, 1
          %s237 = scalar_lea.sflag [#allocation7], %s236
          %s238 = sand.u32 %s87, 1
          %s239 = smul.addr %s238, 2
          %s240 = scalar_lea.vmem [#allocation6], %s239
          %s241 = sadd.s32 %s32, %s33
          %243 = vsyncadd %s237, 0
          %s244 = smul.addr %s241, 2
          %s245 = smul.addr %s31, 2
          %s246 = sadd.s32 %s244, %s245
          %s247 = scalar_lea.hbm %s1, %s246
          %s249 = sshll.u32 %s247, 4
          %s250 = int_to_ptr.hbm [resolvable:$true] %s249
          %s251 = sshll.u32 %s240, 4
          %s252 = int_to_ptr.vmem [resolvable:$true] %s251
          %254 = dma.hbm_to_vmem [thread:$0]  %s250, 32, %s252, %s237
        $region28: #{tpu_custom_call.1} parent=19 // pred_fallthru
          _
      $region20: #{tpu_custom_call.1} parent=5 // pred_fallthru
        _
      %p255 = scmp.le.s32.totalorder 1, %s24
      %p256 = scmp.lt.s32.totalorder %s24, 3
      %p257 = pnand %p255, %p256
      %p258 = pneg %p257
      // Predicated region
      $region29: #{tpu_custom_call.1} parent=5 // pred_check
        _
      $region30: #{tpu_custom_call.1} parent=5 // pred_check_branch
        %260 = sbr.rel (%p257) target = $region32
      $region31: #{tpu_custom_call.1} parent=5 // pred_region
        %s261 = ssub.s32 %s24, 1
        %s262 = sand.u32 %s60, 1
        %s263 = scalar_lea.sflag [#allocation3], %s262
        %s264 = sand.u32 %s60, 1
        %s265 = smul.addr %s264, 8
        %s266 = scalar_lea.vmem [#allocation2], %s265
        // Predicated region
        $region33: #{tpu_custom_call.1} parent=31 // pred_check
          %p267 = pneg %p73
        $region34: #{tpu_custom_call.1} parent=31 // pred_check_branch
          %269 = sbr.rel (%p267) target = $region36
        $region35: #{tpu_custom_call.1} parent=31 // pred_region
          %271 = dma.done %s263, 128
        $region36: #{tpu_custom_call.1} parent=31 // pred_fallthru
          _
        %s272 = sand.u32 %s90, 1
        %s273 = scalar_lea.sflag [#allocation7], %s272
        %s274 = sand.u32 %s90, 1
        %s275 = smul.addr %s274, 2
        %s276 = scalar_lea.vmem [#allocation6], %s275
        // Predicated region
        $region37: #{tpu_custom_call.1} parent=31 // pred_check
          %p277 = pneg %p103
        $region38: #{tpu_custom_call.1} parent=31 // pred_check_branch
          %279 = sbr.rel (%p277) target = $region40
        $region39: #{tpu_custom_call.1} parent=31 // pred_region
          %281 = dma.done %s273, 32
        $region40: #{tpu_custom_call.1} parent=31 // pred_fallthru
          _
        // Predicated region
        $region41: #{tpu_custom_call.1} parent=31 // pred_check
          %p282 = pneg %p124
        $region42: #{tpu_custom_call.1} parent=31 // pred_check_branch
          %284 = sbr.rel (%p282) target = $region44
        $region43: #{tpu_custom_call.1} parent=31 // pred_region
          %286 = dma.done [#allocation5], 16
        $region44: #{tpu_custom_call.1} parent=31 // pred_fallthru
          _
        %287 = sfence
        %s288 = sand.u32 %s60, 1
        %s289 = scalar_lea.sflag [#allocation3], %s288
        %s290 = sand.u32 %s60, 1
        %s291 = smul.addr %s290, 8
        %s292 = scalar_lea.vmem [#allocation2], %s291
        %p293 = pneg %p73
        %p294 = pneg %p70
        %s295 = sand.u32 %s90, 1
        %s296 = scalar_lea.sflag [#allocation7], %s295
        %s297 = sand.u32 %s90, 1
        %s298 = smul.addr %s297, 2
        %s299 = scalar_lea.vmem [#allocation6], %s298
        %p300 = pneg %p103
        %p301 = pneg %p100
        %p302 = pneg %p124
        %p303 = pneg %p121
        %p304 = pneg %p152
        %p305 = pneg %p149
        %s306 = sand.u32 %s139, 1
        %s307 = scalar_lea.sflag [#allocation4], %s306
        %s308 = sand.u32 %s139, 1
        %s309 = smul.addr %s308, 2
        %s310 = scalar_lea.vmem [#allocation9], %s309
        %p311 = pneg %p180
        %p312 = pneg %p177
        %s313 = sand.u32 %s167, 1
        %s314 = scalar_lea.sflag [#allocation11], %s313
        %s315 = sand.u32 %s167, 1
        %s316 = smul.addr %s315, 2
        %s317 = scalar_lea.vmem [#allocation10], %s316
        %s318 = sadd.s32 %s35, %s36
        %s319 = sadd.s32 %s35, %s36
        %p320 = scmp.eq.s32.totalorder %s36, 0
        // Predicated region
        $region45: #{tpu_custom_call.1} parent=31 // pred_check
          %p321 = pneg %p320
        $region46: #{tpu_custom_call.1} parent=31 // pred_check_branch
          %323 = sbr.rel (%p321) target = $region48
        $region47: #{tpu_custom_call.1} parent=31 // pred_region
          %v324 = vlaneseq
          %vm325 = vcmp.ge.s32.totalorder %v324, 0
          %vm326 = vcmp.lt.s32.totalorder %v324, 256
          %vm327 = vmand %vm325, %vm326
          %328 = vst.msk [vmem:[%s310] sm:$0x3] %vm327, 0.0
          %329 = vst.msk [vmem:[%s317] sm:$0x3] %vm327, 0.0
        $region48: #{tpu_custom_call.1} parent=31 // pred_fallthru
          _
        %v330 = vld [vmem:[%s276] sm:$0x3]
        %v331 = vld [vmem:[%s266] sm:$0x3]
        %s332 = scalar_lea.vmem %s266, 2 [#allocation2]
        %v333 = vld [vmem:[%s332] sm:$0x3]
        %v334 = vmax.f32 %v331, %v333
        %s335 = scalar_lea.vmem %s266, 4 [#allocation2]
        %v336 = vld [vmem:[%s335] sm:$0x3]
        %v337 = vmax.f32 %v334, %v336
        %s338 = scalar_lea.vmem %s266, 6 [#allocation2]
        %v339 = vld [vmem:[%s338] sm:$0x3]
        %v340 = vmax.f32 %v337, %v339
        %v341 = vsub.f32 %v331, %v340
        %v342 = vmul.f32 %v341, 1.442695
        %v343 = vpow.pop %v342
        %v344 = vadd.f32 %v343, 0.0
        %vm345 = vcmp.eq.s32.totalorder %v330, 0
        %v346 = vsel %vm345, %v331, 0.0
        %s347 = sld [smem:[#allocation8]]
        %v348 = vstv %s347
        %v349 = vsel %vm345, %v348, 0.0
        %v350 = vsub.f32 %v333, %v340
        %v351 = vmul.f32 %v350, 1.442695
        %v352 = vpow.pop %v351
        %v353 = vadd.f32 %v344, %v352
        %vm354 = vcmp.eq.s32.totalorder %v330, 1
        %v355 = vsel %vm354, %v333, %v346
        %s356 = sld [smem:[#allocation8 + $0x1]]
        %v357 = vstv %s356
        %v358 = vsel %vm354, %v357, %v349
        %v359 = vsub.f32 %v336, %v340
        %v360 = vmul.f32 %v359, 1.442695
        %v361 = vpow.pop %v360
        %v362 = vadd.f32 %v353, %v361
        %vm363 = vcmp.eq.s32.totalorder %v330, 2
        %v364 = vsel %vm363, %v336, %v355
        %s365 = sld [smem:[#allocation8 + $0x2]]
        %v366 = vstv %s365
        %v367 = vsel %vm363, %v366, %v358
        %v368 = vsub.f32 %v339, %v340
        %v369 = vmul.f32 %v368, 1.442695
        %v370 = vpow.pop %v369
        %v371 = vadd.f32 %v362, %v370
        %vm372 = vcmp.eq.s32.totalorder %v330, 3
        %v373 = vsel %vm372, %v339, %v364
        %s374 = sld [smem:[#allocation8 + $0x3]]
        %v375 = vstv %s374
        %v376 = vsel %vm372, %v375, %v367
        %v377 = vlog2.pop %v371
        %v378 = vmul.f32 %v377, 0.6931472
        %v379 = vsub.f32 %v373, %v340
        %v380 = vsub.f32 %v379, %v378
        %v381 = vmul.f32 %v380, 1.442695
        %v382 = vpow.pop %v381
        %v383 = vadd.f32 %v382, 1e-10
        %v384 = vlog2.pop %v383
        %v385 = vmul.f32 %v384, 0.6931472
        %v386 = vsub.f32 1.0, %v383
        %v387 = vmul.f32 %v386, %v386
        %v388 = vsub.f32 0.0, %v387
        %v389 = vmul.f32 %v388, %v385
        %v390 = vld [vmem:[%s310] sm:$0x3]
        %v391 = vadd.f32 %v390, %v389
        %v392 = vlaneseq
        %vm393 = vcmp.ge.s32.totalorder %v392, 0
        %vm394 = vcmp.lt.s32.totalorder %v392, 256
        %vm395 = vmand %vm393, %vm394
        %396 = vst.msk [vmem:[%s310] sm:$0x3] %vm395, %v391
        %v397 = vld [vmem:[%s317] sm:$0x3]
        %v398 = vadd.f32 %v397, %v376
        %399 = vst.msk [vmem:[%s317] sm:$0x3] %vm395, %v398
        %s400 = sand.u32 %s139, 1
        %s401 = scalar_lea.sflag [#allocation4], %s400
        %s402 = sand.u32 %s139, 1
        %s403 = smul.addr %s402, 2
        %s404 = scalar_lea.vmem [#allocation9], %s403
        %s405 = sand.u32 %s167, 1
        %s406 = scalar_lea.sflag [#allocation11], %s405
        %s407 = sand.u32 %s167, 1
        %s408 = smul.addr %s407, 2
        %s409 = scalar_lea.vmem [#allocation10], %s408
        // Predicated region
        $region49: #{tpu_custom_call.1} parent=31 // pred_check
          %p410 = pneg %p149
        $region50: #{tpu_custom_call.1} parent=31 // pred_check_branch
          %412 = sbr.rel (%p410) target = $region52
        $region51: #{tpu_custom_call.1} parent=31 // pred_region
          %414 = vsyncadd %s401, 0
          %s415 = smul.addr %s35, 2
          %s416 = smul.addr %s34, 2
          %s417 = sadd.s32 %s415, %s416
          %s418 = scalar_lea.hbm %s3, %s417
          %s420 = sshll.u32 %s404, 4
          %s421 = int_to_ptr.vmem [resolvable:$true] %s420
          %s422 = sshll.u32 %s418, 4
          %s423 = int_to_ptr.hbm [resolvable:$true] %s422
          %425 = dma.vmem_to_hbm [thread:$0]  %s421, 32, %s423, %s401
        $region52: #{tpu_custom_call.1} parent=31 // pred_fallthru
          _
        // Predicated region
        $region53: #{tpu_custom_call.1} parent=31 // pred_check
          %p426 = pneg %p177
        $region54: #{tpu_custom_call.1} parent=31 // pred_check_branch
          %428 = sbr.rel (%p426) target = $region56
        $region55: #{tpu_custom_call.1} parent=31 // pred_region
          %430 = vsyncadd %s406, 0
          %s431 = smul.addr %s35, 2
          %s432 = smul.addr %s34, 2
          %s433 = sadd.s32 %s431, %s432
          %s434 = scalar_lea.hbm %s4, %s433
          %s436 = sshll.u32 %s409, 4
          %s437 = int_to_ptr.vmem [resolvable:$true] %s436
          %s438 = sshll.u32 %s434, 4
          %s439 = int_to_ptr.hbm [resolvable:$true] %s438
          %441 = dma.vmem_to_hbm [thread:$0]  %s437, 32, %s439, %s406
        $region56: #{tpu_custom_call.1} parent=31 // pred_fallthru
          _
      $region32: #{tpu_custom_call.1} parent=5 // pred_fallthru
        _
      %p442 = scmp.le.s32.totalorder 2, %s24
      // Predicated region
      $region57: #{tpu_custom_call.1} parent=5 // pred_check
        %p443 = pneg %p442
      $region58: #{tpu_custom_call.1} parent=5 // pred_check_branch
        %445 = sbr.rel (%p443) target = $region60
      $region59: #{tpu_custom_call.1} parent=5 // pred_region
        %s446 = ssub.s32 %s24, 2
        // Predicated region
        $region61: #{tpu_custom_call.1} parent=59 // pred_check
          %p447 = pneg %p155
        $region62: #{tpu_custom_call.1} parent=59 // pred_check_branch
          %449 = sbr.rel (%p447) target = $region64
        $region63: #{tpu_custom_call.1} parent=59 // pred_region
          %s450 = sand.u32 %s140, 1
          %s451 = scalar_lea.sflag [#allocation4], %s450
          %s452 = sand.u32 %s140, 1
          %s453 = smul.addr %s452, 2
          %s454 = scalar_lea.vmem [#allocation9], %s453
          %456 = dma.done %s451, 32
        $region64: #{tpu_custom_call.1} parent=59 // pred_fallthru
          _
        // Predicated region
        $region65: #{tpu_custom_call.1} parent=59 // pred_check
          %p457 = pneg %p183
        $region66: #{tpu_custom_call.1} parent=59 // pred_check_branch
          %459 = sbr.rel (%p457) target = $region68
        $region67: #{tpu_custom_call.1} parent=59 // pred_region
          %s460 = sand.u32 %s168, 1
          %s461 = scalar_lea.sflag [#allocation11], %s460
          %s462 = sand.u32 %s168, 1
          %s463 = smul.addr %s462, 2
          %s464 = scalar_lea.vmem [#allocation10], %s463
          %466 = dma.done %s461, 32
        $region68: #{tpu_custom_call.1} parent=59 // pred_fallthru
          _
      $region60: #{tpu_custom_call.1} parent=5 // pred_fallthru
        _
    $region6: #{tpu_custom_call.1} parent=1 // loop_footer
      %s28 = sadd.s32 1, %s24
    $region7: #{tpu_custom_call.1} parent=1 // loop_footer_branch
      %23 = sbr.rel target = $region3
    $region8: #{tpu_custom_call.1} parent=1 // loop_exit
      _
    %467 = vsyncpa [#allocation3], 1
    %s468 = scalar_lea.sflag [#allocation3], 1
    %469 = vsyncpa %s468, 1
    %470 = vsyncpa [#allocation7], 1
    %s471 = scalar_lea.sflag [#allocation7], 1
    %472 = vsyncpa %s471, 1
    %473 = vsyncpa [#allocation4], 1
    %s474 = scalar_lea.sflag [#allocation4], 1
    %475 = vsyncpa %s474, 1
    %476 = vsyncpa [#allocation11], 1
    %s477 = scalar_lea.sflag [#allocation11], 1
    %478 = vsyncpa %s477, 1
    %479 = vsyncpa [#allocation5], 1
    %s480 = scalar_lea.sflag [#allocation5], 1
    %481 = vsyncpa %s480, 1

</llo_original>
